<compile_context>
chip_gen: v7x
topology: tpu7x:2x2x1
jax: 0.10.0
libtpu: 0.0.40
codegen_flags: <defaults>
</compile_context>

<pallas_src>
import math

import jax
import jax.numpy as jnp
from jax.experimental import pallas as pl
from jax.experimental.pallas import tpu as pltpu


_SQRT_2_OVER_PI = 0.7978845608028654


def _attention_gate_kernel(x_ref, g_ref, w_ref, p_ref, o_ref):
    """One (TN, C, TP) tile: TN batch elements x all C channels x TP pixels.

    x_ref, g_ref, o_ref : (TN, C, TP) VMEM tiles (channels on sublanes, pixels
                          on lanes -> lane-dense loads/stores).
    w_ref               : (C, 1) f32 1x1-conv weight; constant index_map keeps
                          it resident in VMEM across all grid steps.
    p_ref               : (4,) f32 SMEM scalars [conv_bias, ln_weight, ln_bias, eps].
    """
    conv_b = p_ref[0]
    ln_w = p_ref[1]
    ln_b = p_ref[2]
    eps = p_ref[3]

    x = x_ref[...].astype(jnp.float32)
    s = x + g_ref[...].astype(jnp.float32)

    # GELU (tanh approximation).  torch.nn.GELU() defaults to the exact erf
    # form, but LayerNorm over a size-1 channel maps every finite activation
    # to its bias, so the gate's final output is identical either way.
    # TODO(synk): swap in exact erf-based GELU if bit-level parity with
    # torch's intermediate activations is ever required.
    s = 0.5 * s * (1.0 + jnp.tanh(_SQRT_2_OVER_PI * (s + 0.044715 * s * s * s)))

    # ChannelModification(C, 1): 1x1 conv to one channel == weighted sum over
    # the (small) channel / sublane axis.  Result stays lane-dense: (TN, 1, TP).
    pre = jnp.sum(w_ref[...] * s, axis=-2, keepdims=True) + conv_b

    # LayerNorm2d(1): the normalization group is the single output channel,
    # so mean == value and the (biased) variance == 0.
    mu = pre
    var = jnp.zeros_like(pre)
    normed = (pre - mu) * jax.lax.rsqrt(var + eps)
    att = jax.nn.sigmoid(ln_w * normed + ln_b)                 # (TN, 1, TP)

    # Gate: broadcast the attention row over all channels; full-width store.
    o_ref[...] = (x * att).astype(o_ref.dtype)


def _choose_tiles(N, C, M, target_bytes):
    """Pick (TN, TP) so each input tile is ~target_bytes (f32)."""
    col_bytes = max(1, C * 4)                      # all channels of one pixel
    tp_budget = max(128, target_bytes // col_bytes)
    if M <= tp_budget:
        tp = M                                     # full extent: always legal
        tn = min(N, max(1, tp_budget // max(M, 1)))
        while N % tn:                              # no partial batch blocks
            tn -= 1
    else:
        tp = (tp_budget // 128) * 128              # lane-aligned (mult. of 128)
        tn = 1
    return tn, tp


def _attention_gate_pallas(x3, g3, w_col, params, *, tile_target_bytes=1 << 20):
    """x3, g3: (N, C, M); w_col: (C, 1) f32; params: (4,) f32 -> (N, C, M)."""
    N, C, M = x3.shape
    tn, tp = _choose_tiles(N, C, M, tile_target_bytes)
    grid = (N // tn, pl.cdiv(M, tp))               # ragged pixel tail is fine

    return pl.pallas_call(
        _attention_gate_kernel,
        out_shape=jax.ShapeDtypeStruct((N, C, M), x3.dtype),
        grid_spec=pltpu.PrefetchScalarGridSpec(
            num_scalar_prefetch=0,
            grid=grid,
            in_specs=[
                pl.BlockSpec((tn, C, tp), lambda n, p: (n, 0, p)),      # x tile
                pl.BlockSpec((tn, C, tp), lambda n, p: (n, 0, p)),      # g tile
                pl.BlockSpec((C, 1), lambda n, p: (0, 0)),              # conv w
                pl.BlockSpec(memory_space=pltpu.MemorySpace.SMEM),      # scalars
            ],
            out_specs=pl.BlockSpec((tn, C, tp), lambda n, p: (n, 0, p)),
        ),
        compiler_params=pltpu.CompilerParams(
            dimension_semantics=("parallel", "parallel")),
    )(x3, g3, w_col, params)


class AttentionGate:
    """JAX/Pallas port of the PyTorch AttentionGate module (forward pass)."""

    def __init__(self, channels: int, eps: float = 1e-6, key=None, *,
                 tile_target_bytes: int = 1 << 20):
        self.channels = channels
        self.eps = float(eps)
        self.tile_target_bytes = int(tile_target_bytes)

        if key is None:
            key = jax.random.PRNGKey(0)

        if channels != 1:
            # nn.Conv2d(channels, 1, kernel_size=1) default init:
            # kaiming-uniform bound = 1/sqrt(fan_in), fan_in = channels * 1 * 1.
            kw, kb = jax.random.split(key)
            bound = 1.0 / math.sqrt(channels)
            self.conv_w = jax.random.uniform(kw, (channels,), jnp.float32,
                                             -bound, bound)
            self.conv_b = jax.random.uniform(kb, (), jnp.float32, -bound, bound)
        else:
            # ChannelModification(1, 1) is nn.Identity; weight=1, bias=0
            # reproduces it through the same fused kernel.
            self.conv_w = jnp.ones((1,), jnp.float32)
            self.conv_b = jnp.zeros((), jnp.float32)

        # LayerNorm2d(1) defaults.
        self.ln_w = jnp.ones((), jnp.float32)
        self.ln_b = jnp.zeros((), jnp.float32)

    def __call__(self, x: jax.Array, g: jax.Array) -> jax.Array:
        assert x.shape == g.shape
        N, C, H, W = x.shape
        assert C == self.channels
        M = H * W

        # NCHW -> (N, C, H*W): reshape only (no transpose, no extra HBM pass).
        x3 = x.reshape(N, C, M)
        g3 = g.reshape(N, C, M)

        w_col = self.conv_w.reshape(C, 1).astype(jnp.float32)
        params = jnp.array([self.conv_b, self.ln_w, self.ln_b, self.eps],
                           dtype=jnp.float32)

        y3 = _attention_gate_pallas(x3, g3, w_col, params,
                                    tile_target_bytes=self.tile_target_bytes)
        return y3.reshape(N, C, H, W)


def _reference_forward(gate: AttentionGate, x: jax.Array, g: jax.Array) -> jax.Array:
    """Pure-JAX reference (same GELU approximation as the kernel)."""
    s = x + g
    s = 0.5 * s * (1.0 + jnp.tanh(_SQRT_2_OVER_PI * (s + 0.044715 * s * s * s)))
    pre = jnp.einsum("c,nchw->nhw", gate.conv_w, s)[:, None, :, :] + gate.conv_b
    mu = pre
    var = jnp.zeros_like(pre)
    att = gate.ln_w * (pre - mu) * jax.lax.rsqrt(var + gate.eps) + gate.ln_b
    att = jax.nn.sigmoid(att)
    return x * att


if __name__ == "__main__":
    key = jax.random.PRNGKey(0)
    kx, kg, kp = jax.random.split(key, 3)

    # Config 1: small NCHW inputs; the whole batch folds into a single
    # (TN=2, C, M) tile -> exercises batch folding.
    N, C, H, W = 2, 4, 16, 16
    x = jax.random.normal(kx, (N, C, H, W), jnp.float32)
    g = jax.random.normal(kg, (N, C, H, W), jnp.float32)

    gate = AttentionGate(C, key=kp)
    y = jax.block_until_ready(gate(x, g))
    assert y.shape == (N, C, H, W), y.shape
    y_ref = _reference_forward(gate, x, g)
    assert jnp.allclose(y, y_ref, atol=1e-5, rtol=1e-5)

    # Config 2: non-default LayerNorm affine params and a tiny tile budget so
    # M = 576 is split into 256-pixel tiles with a ragged tail (exercises the
    # cdiv / partial-lane-tile path and TN=1).
    gate2 = AttentionGate(C, key=kp, tile_target_bytes=4096)
    gate2.ln_w = jnp.float32(1.5)
    gate2.ln_b = jnp.float32(0.3)
    H2, W2 = 24, 24
    x2 = jax.random.normal(kx, (N, C, H2, W2), jnp.float32)
    g2 = jax.random.normal(kg, (N, C, H2, W2), jnp.float32)
    y2 = jax.block_until_ready(gate2(x2, g2))
    assert y2.shape == (N, C, H2, W2), y2.shape
    y2_ref = _reference_forward(gate2, x2, g2)
    assert jnp.allclose(y2, y2_ref, atol=1e-5, rtol=1e-5)

    print("KERNEL_OK")
</pallas_src>

<mosaic_0001>
module attributes {stable_mosaic.version = 11 : i64} {
  func.func @_attention_gate_kernel(%arg0: i32, %arg1: i32, %arg2: memref<2x4x256xf32, #tpu.memory_space<vmem>>, %arg3: memref<2x4x256xf32, #tpu.memory_space<vmem>>, %arg4: memref<4x1xf32, #tpu.memory_space<vmem>>, %arg5: memref<4xf32, #tpu.memory_space<smem>>, %arg6: memref<2x4x256xf32, #tpu.memory_space<vmem>>) attributes {dimension_semantics = [#tpu.dimension_semantics<parallel>, #tpu.dimension_semantics<parallel>], iteration_bounds = array<i64: 1, 1>, scalar_prefetch = 0 : i64, scratch_operands = 0 : i64, tpu.core_type = #tpu.core_type<tc>, window_params = [{transform_indices = @transform_0, window_bounds = array<i64: 2, 4, 256>}, {transform_indices = @transform_1, window_bounds = array<i64: 2, 4, 256>}, {pipeline_mode = #tpu.pipeline_mode<synchronous>, transform_indices = @transform_2, window_bounds = array<i64: 4, 1>}, {transform_indices = @transform_3, window_bounds = array<i64: 4>}, {transform_indices = @transform_4, window_bounds = array<i64: 2, 4, 256>}]} {
    %c0 = arith.constant 0 : index
    %0 = memref.load %arg5[%c0] : memref<4xf32, #tpu.memory_space<smem>>
    %c1 = arith.constant 1 : index
    %1 = memref.load %arg5[%c1] : memref<4xf32, #tpu.memory_space<smem>>
    %c2 = arith.constant 2 : index
    %2 = memref.load %arg5[%c2] : memref<4xf32, #tpu.memory_space<smem>>
    %c3 = arith.constant 3 : index
    %3 = memref.load %arg5[%c3] : memref<4xf32, #tpu.memory_space<smem>>
    %c0_0 = arith.constant 0 : index
    %c0_1 = arith.constant 0 : index
    %c0_2 = arith.constant 0 : index
    %4 = vector.load %arg2[%c0_0, %c0_1, %c0_2] : memref<2x4x256xf32, #tpu.memory_space<vmem>>, vector<2x4x256xf32>
    %c0_3 = arith.constant 0 : index
    %c0_4 = arith.constant 0 : index
    %c0_5 = arith.constant 0 : index
    %5 = vector.load %arg3[%c0_3, %c0_4, %c0_5] : memref<2x4x256xf32, #tpu.memory_space<vmem>>, vector<2x4x256xf32>
    %6 = arith.addf %4, %5 : vector<2x4x256xf32>
    %cst = arith.constant 5.000000e-01 : f32
    %7 = vector.broadcast %cst : f32 to vector<2x4x256xf32>
    %8 = arith.mulf %7, %6 : vector<2x4x256xf32>
    %cst_6 = arith.constant 4.471500e-02 : f32
    %9 = vector.broadcast %cst_6 : f32 to vector<2x4x256xf32>
    %10 = arith.mulf %9, %6 : vector<2x4x256xf32>
    %11 = arith.mulf %10, %6 : vector<2x4x256xf32>
    %12 = arith.mulf %11, %6 : vector<2x4x256xf32>
    %13 = arith.addf %6, %12 : vector<2x4x256xf32>
    %cst_7 = arith.constant 0.797884583 : f32
    %14 = vector.broadcast %cst_7 : f32 to vector<2x4x256xf32>
    %15 = arith.mulf %14, %13 : vector<2x4x256xf32>
    %16 = math.tanh %15 : vector<2x4x256xf32>
    %cst_8 = arith.constant 1.000000e+00 : f32
    %17 = vector.broadcast %cst_8 : f32 to vector<2x4x256xf32>
    %18 = arith.addf %17, %16 : vector<2x4x256xf32>
    %19 = arith.mulf %8, %18 : vector<2x4x256xf32>
    %c0_9 = arith.constant 0 : index
    %c0_10 = arith.constant 0 : index
    %20 = vector.load %arg4[%c0_9, %c0_10] : memref<4x1xf32, #tpu.memory_space<vmem>>, vector<4x1xf32>
    %21 = vector.shape_cast %20 : vector<4x1xf32> to vector<1x4x1xf32>
    %22 = vector.broadcast %21 : vector<1x4x1xf32> to vector<2x4x256xf32>
    %23 = arith.mulf %22, %19 : vector<2x4x256xf32>
    %cst_11 = arith.constant dense<0.000000e+00> : vector<2x256xf32>
    %24 = vector.multi_reduction <add>, %23, %cst_11 [1] : vector<2x4x256xf32> to vector<2x256xf32>
    %25 = vector.shape_cast %24 : vector<2x256xf32> to vector<2x1x256xf32>
    %26 = vector.broadcast %0 : f32 to vector<2x1x256xf32>
    %27 = arith.addf %25, %26 : vector<2x1x256xf32>
    %cst_12 = arith.constant 0.000000e+00 : f32
    %28 = vector.broadcast %cst_12 : f32 to vector<2x1x256xf32>
    %29 = arith.subf %27, %27 : vector<2x1x256xf32>
    %30 = vector.broadcast %3 : f32 to vector<2x1x256xf32>
    %31 = arith.addf %28, %30 : vector<2x1x256xf32>
    %32 = math.rsqrt %31 : vector<2x1x256xf32>
    %33 = arith.mulf %29, %32 : vector<2x1x256xf32>
    %34 = vector.broadcast %1 : f32 to vector<2x1x256xf32>
    %35 = arith.mulf %34, %33 : vector<2x1x256xf32>
    %36 = vector.broadcast %2 : f32 to vector<2x1x256xf32>
    %37 = arith.addf %35, %36 : vector<2x1x256xf32>
    %38 = arith.negf %37 : vector<2x1x256xf32>
    %39 = math.exp %38 : vector<2x1x256xf32>
    %cst_13 = arith.constant 1.000000e+00 : f32
    %40 = vector.broadcast %cst_13 : f32 to vector<2x1x256xf32>
    %41 = arith.addf %40, %39 : vector<2x1x256xf32>
    %42 = arith.divf %40, %41 : vector<2x1x256xf32>
    %43 = vector.broadcast %42 : vector<2x1x256xf32> to vector<2x4x256xf32>
    %44 = arith.mulf %4, %43 : vector<2x4x256xf32>
    %c0_14 = arith.constant 0 : index
    %c0_15 = arith.constant 0 : index
    %c0_16 = arith.constant 0 : index
    %45 = vector.load %arg6[%c0_14, %c0_15, %c0_16] : memref<2x4x256xf32, #tpu.memory_space<vmem>>, vector<2x4x256xf32>
    tpu.vector_store %arg6[%c0_14, %c0_15, %c0_16], %44 {strides = array<i32>} : memref<2x4x256xf32, #tpu.memory_space<vmem>>, vector<2x4x256xf32>,
    return
  }
  func.func @transform_0(%arg0: i32, %arg1: i32) -> (i32, i32, i32) {
    %c0_i32 = arith.constant 0 : i32
    %c0_i32_0 = arith.constant 0 : i32
    return %arg0, %c0_i32, %arg1 : i32, i32, i32
  }
  func.func @transform_1(%arg0: i32, %arg1: i32) -> (i32, i32, i32) {
    %c0_i32 = arith.constant 0 : i32
    %c0_i32_0 = arith.constant 0 : i32
    return %arg0, %c0_i32, %arg1 : i32, i32, i32
  }
  func.func @transform_2(%arg0: i32, %arg1: i32) -> (i32, i32) {
    %c0_i32 = arith.constant 0 : i32
    %c0_i32_0 = arith.constant 0 : i32
    %c0_i32_1 = arith.constant 0 : i32
    return %c0_i32, %c0_i32_0 : i32, i32
  }
  func.func @transform_3(%arg0: i32, %arg1: i32) -> i32 {
    %c0_i32 = arith.constant 0 : i32
    %c0_i32_0 = arith.constant 0 : i32
    return %c0_i32 : i32
  }
  func.func @transform_4(%arg0: i32, %arg1: i32) -> (i32, i32, i32) {
    %c0_i32 = arith.constant 0 : i32
    %c0_i32_0 = arith.constant 0 : i32
    return %arg0, %c0_i32, %arg1 : i32, i32, i32
  }
}

</mosaic_0001>

<llo_original>
// kernel: tpu_custom_call.1
$region0: #{tpu_custom_call.1}
  #allocation0 [shape = 'u32[]', space=smem, size = 0x4, offset = 0x4, fixed_abs, tag = 'smem constant byte address 0x4 - core index']
  #allocation1 [shape = 'u32[144,128]{1,0:T(1,128)}', space=vmem, size = 0x12000, scoped, tag = 'internal scratch']
  %s0 = inlined_call_operand.hbm [shape: f32[2,4,256], index: 0, kind: input, shape index: {}]
  %s1 = inlined_call_operand.hbm [shape: f32[2,4,256], index: 1, kind: input, shape index: {}]
  %s2 = inlined_call_operand.vmem [shape: f32[4,1], index: 2, kind: input, shape index: {}]
  %s3 = inlined_call_operand.vmem [shape: f32[4], index: 3, kind: input, shape index: {}]
  %s4 = inlined_call_operand.hbm [shape: f32[2,4,256], index: 4, kind: output, shape index: {}]
  %s5 = sld [smem:[#allocation0]]
  $region38: #{tpu_custom_call.1} parent=0
    _
  %s7 = ssub.s32 1, %s5
  %s8 = scalar_select 0, %s7, %s5
  $region1: #{tpu_custom_call.1} parent=0
    #allocation2 [shape = 'u8[8192]{0}', space=vmem, size = 0x2000, scoped, tag = 'input window, operand 0, single buffered']
    #allocation3 [shape = 's32[1]{0}', space=sflag, size = 0x4, scoped, tag = 'scoped memory for tpu_custom_call.1']
    #allocation4 [shape = 's32[1]{0}', space=sflag, size = 0x4, scoped, tag = 'scoped memory for tpu_custom_call.1']
    #allocation5 [shape = 's32[1]{0}', space=sflag, size = 0x4, scoped, tag = 'scoped memory for tpu_custom_call.1']
    #allocation6 [shape = 'u8[8192]{0}', space=vmem, size = 0x2000, scoped, tag = 'input window, operand 1, single buffered']
    #allocation7 [shape = 's32[1]{0}', space=sflag, size = 0x4, scoped, tag = 'scoped memory for tpu_custom_call.1']
    #allocation8 [shape = 'u8[512]{0}', space=smem, size = 0x200, scoped, tag = 'input window, operand 3, single buffered']
    #allocation9 [shape = 'u8[8192]{0}', space=vmem, size = 0x2000, scoped, tag = 'output window, operand 0, single buffered']
    %9 = vsyncpa [#allocation3], 0
    %10 = vsyncpa [#allocation7], 0
    %11 = vsyncpa [#allocation5], 0
    %12 = vsyncpa [#allocation4], 0
    // Predicated region
    $region2: #{tpu_custom_call.1} parent=1 // pred_check
      _
    $region3: #{tpu_custom_call.1} parent=1 // pred_check_branch
      %14 = sbr.rel (0) target = $region5
    $region4: #{tpu_custom_call.1} parent=1 // pred_region
      %s16 = ssub.s32 256, 256
      %17 = vsyncadd [#allocation3], %s16
      %s18 = sshll.u32 [#allocation2], 4
      %s19 = int_to_ptr.vmem [resolvable:$true] %s18
      %24 = dma.hbm_to_vmem [thread:$0]  %s0, 256, %s19, [#allocation3], 128, 128, 8
    $region5: #{tpu_custom_call.1} parent=1 // pred_fallthru
      _
    // Predicated region
    $region6: #{tpu_custom_call.1} parent=1 // pred_check
      _
    $region7: #{tpu_custom_call.1} parent=1 // pred_check_branch
      %26 = sbr.rel (0) target = $region9
    $region8: #{tpu_custom_call.1} parent=1 // pred_region
      %s28 = ssub.s32 256, 256
      %29 = vsyncadd [#allocation7], %s28
      %s30 = sshll.u32 [#allocation6], 4
      %s31 = int_to_ptr.vmem [resolvable:$true] %s30
      %36 = dma.hbm_to_vmem [thread:$0]  %s1, 256, %s31, [#allocation7], 128, 128, 8
    $region9: #{tpu_custom_call.1} parent=1 // pred_fallthru
      _
    // Predicated region
    $region10: #{tpu_custom_call.1} parent=1 // pred_check
      _
    $region11: #{tpu_custom_call.1} parent=1 // pred_check_branch
      %38 = sbr.rel (0) target = $region13
    $region12: #{tpu_custom_call.1} parent=1 // pred_region
      _
    $region13: #{tpu_custom_call.1} parent=1 // pred_fallthru
      _
    // Predicated region
    $region14: #{tpu_custom_call.1} parent=1 // pred_check
      _
    $region15: #{tpu_custom_call.1} parent=1 // pred_check_branch
      %40 = sbr.rel (0) target = $region17
    $region16: #{tpu_custom_call.1} parent=1 // pred_region
      %s42 = ssub.s32 16, 16
      %43 = vsyncadd [#allocation5], %s42
      %s45 = sshll.u32 %s3, 4
      %s46 = int_to_ptr.vmem [resolvable:$true] %s45
      %48 = dma.vmem_to_smem %s46, 16, [#allocation8], [#allocation5]
    $region17: #{tpu_custom_call.1} parent=1 // pred_fallthru
      _
    // Predicated region
    $region18: #{tpu_custom_call.1} parent=1 // pred_check
      _
    $region19: #{tpu_custom_call.1} parent=1 // pred_check_branch
      %50 = sbr.rel (0) target = $region21
    $region20: #{tpu_custom_call.1} parent=1 // pred_region
      %51 = dma.done [#allocation3], 256
    $region21: #{tpu_custom_call.1} parent=1 // pred_fallthru
      _
    // Predicated region
    $region22: #{tpu_custom_call.1} parent=1 // pred_check
      _
    $region23: #{tpu_custom_call.1} parent=1 // pred_check_branch
      %53 = sbr.rel (0) target = $region25
    $region24: #{tpu_custom_call.1} parent=1 // pred_region
      %54 = dma.done [#allocation7], 256
    $region25: #{tpu_custom_call.1} parent=1 // pred_fallthru
      _
    // Predicated region
    $region26: #{tpu_custom_call.1} parent=1 // pred_check
      _
    $region27: #{tpu_custom_call.1} parent=1 // pred_check_branch
      %56 = sbr.rel (0) target = $region29
    $region28: #{tpu_custom_call.1} parent=1 // pred_region
      %57 = dma.done [#allocation5], 16
    $region29: #{tpu_custom_call.1} parent=1 // pred_fallthru
      _
    %58 = sfence
    %s59 = sld [smem:[#allocation8]]
    %s60 = sld [smem:[#allocation8 + $0x1]]
    %s61 = sld [smem:[#allocation8 + $0x2]]
    %s62 = sld [smem:[#allocation8 + $0x3]]
    %v63 = vld [vmem:[#allocation2] sm:$0xff]
    %v64 = vld [vmem:[#allocation2 + $0x8] sm:$0xff]
    %v65 = vld [vmem:[#allocation6] sm:$0xff]
    %v66 = vld [vmem:[#allocation6 + $0x8] sm:$0xff]
    %v67 = vadd.f32 %v63, %v65
    %v68 = vadd.f32 %v64, %v66
    %v69 = vmul.f32 %v67, 0.5
    %v70 = vmul.f32 %v68, 0.5
    %v71 = vmul.f32 %v67, 0.044715
    %v72 = vmul.f32 %v68, 0.044715
    %v73 = vmul.f32 %v71, %v67
    %v74 = vmul.f32 %v72, %v68
    %v75 = vmul.f32 %v73, %v67
    %v76 = vmul.f32 %v74, %v68
    %v77 = vadd.f32 %v67, %v75
    %v78 = vadd.f32 %v68, %v76
    %v79 = vmul.f32 %v77, 0.7978846
    %v80 = vmul.f32 %v78, 0.7978846
    %v81 = vtanh.pop %v79
    %v82 = vtanh.pop %v80
    %v83 = vadd.f32 %v81, 1.0
    %v84 = vadd.f32 %v82, 1.0
    %v85 = vmul.f32 %v69, %v83
    %v86 = vmul.f32 %v70, %v84
    %v87 = vld [vmem:[%s2] sm:$0xf]
    %89 = vset.pattern.permute.xlu0 0
    %90 = vperm.xlu0 %89, %v87
    %v91 = vpop.permute.xlu0 %90
    %v95 = vcombine.high %v85, %v85
    %v96 = vcombine.high %v86, %v86
    %v99 = vmul.f32 %v91, %v85
    %v100 = vmul.f32 %v91, %v95
    %v101 = vmul.f32 %v91, %v86
    %v102 = vmul.f32 %v91, %v96
    %vm103 = vcmask 1043456
    %v104 = vsel %vm103, %v99, 0.0
    %v105 = vrot.slane %v104, 4
    %v106 = vadd.f32 %v104, %v105
    %v107 = vrot.slane %v106, 2
    %v108 = vadd.f32 %v106, %v107
    %v109 = vrot.slane %v108, 1
    %v110 = vadd.f32 %v108, %v109
    %v111 = vsel %vm103, %v100, 0.0
    %v112 = vrot.slane %v111, 4
    %v113 = vadd.f32 %v111, %v112
    %v114 = vrot.slane %v113, 2
    %v115 = vadd.f32 %v113, %v114
    %v116 = vrot.slane %v115, 1
    %v117 = vadd.f32 %v115, %v116
    %v118 = vsel %vm103, %v101, 0.0
    %v119 = vrot.slane %v118, 4
    %v120 = vadd.f32 %v118, %v119
    %v121 = vrot.slane %v120, 2
    %v122 = vadd.f32 %v120, %v121
    %v123 = vrot.slane %v122, 1
    %v124 = vadd.f32 %v122, %v123
    %v125 = vsel %vm103, %v102, 0.0
    %v126 = vrot.slane %v125, 4
    %v127 = vadd.f32 %v125, %v126
    %v128 = vrot.slane %v127, 2
    %v129 = vadd.f32 %v127, %v128
    %v130 = vrot.slane %v129, 1
    %v131 = vadd.f32 %v129, %v130
    %v132 = vstv %s59
    %v133 = vadd.f32 %v110, %v132
    %v134 = vadd.f32 %v117, %v132
    %v135 = vadd.f32 %v124, %v132
    %v136 = vadd.f32 %v131, %v132
    %v137 = vsub.f32 %v133, %v133
    %v138 = vsub.f32 %v134, %v134
    %v139 = vsub.f32 %v135, %v135
    %v140 = vsub.f32 %v136, %v136
    %v141 = vstv %s62
    %v142 = vadd.f32 %v141, 0.0
    %v143 = vrsqrt.pop %v142
    %v144 = vmul.f32 %v137, %v143
    %v145 = vmul.f32 %v138, %v143
    %v146 = vmul.f32 %v139, %v143
    %v147 = vmul.f32 %v140, %v143
    %v148 = vstv %s60
    %v149 = vmul.f32 %v148, %v144
    %v150 = vmul.f32 %v148, %v145
    %v151 = vmul.f32 %v148, %v146
    %v152 = vmul.f32 %v148, %v147
    %v153 = vstv %s61
    %v154 = vadd.f32 %v149, %v153
    %v155 = vadd.f32 %v150, %v153
    %v156 = vadd.f32 %v151, %v153
    %v157 = vadd.f32 %v152, %v153
    %v158 = vxor.u32 %v154, 2147483648
    %v159 = vxor.u32 %v155, 2147483648
    %v160 = vxor.u32 %v156, 2147483648
    %v161 = vxor.u32 %v157, 2147483648
    %v162 = vmul.f32 %v158, 1.442695
    %v163 = vpow.pop %v162
    %v164 = vmul.f32 %v159, 1.442695
    %v165 = vpow.pop %v164
    %v166 = vmul.f32 %v160, 1.442695
    %v167 = vpow.pop %v166
    %v168 = vmul.f32 %v161, 1.442695
    %v169 = vpow.pop %v168
    %v170 = vadd.f32 %v163, 1.0
    %v171 = vadd.f32 %v165, 1.0
    %v172 = vadd.f32 %v167, 1.0
    %v173 = vadd.f32 %v169, 1.0
    %v174 = vrcp.pop %v170
    %v175 = vmul.f32 1.0, %v174
    %v176 = vrcp.pop %v171
    %v177 = vmul.f32 1.0, %v176
    %v178 = vrcp.pop %v172
    %v179 = vmul.f32 1.0, %v178
    %v180 = vrcp.pop %v173
    %v181 = vmul.f32 1.0, %v180
    %v186 = vcombine.low %v175, %v177
    %v187 = vcombine.low %v179, %v181
    %v190 = vmul.f32 %v63, %v186
    %v191 = vmul.f32 %v64, %v187
    %192 = vst [vmem:[#allocation9] sm:$0xff] %v190
    %193 = vst [vmem:[#allocation9 + $0x8] sm:$0xff] %v191
    // Predicated region
    $region30: #{tpu_custom_call.1} parent=1 // pred_check
      _
    $region31: #{tpu_custom_call.1} parent=1 // pred_check_branch
      %195 = sbr.rel (0) target = $region33
    $region32: #{tpu_custom_call.1} parent=1 // pred_region
      %s197 = ssub.s32 256, 256
      %198 = vsyncadd [#allocation4], %s197
      %s199 = sshll.u32 [#allocation9], 4
      %s200 = int_to_ptr.vmem [resolvable:$true] %s199
      %205 = dma.vmem_to_hbm [thread:$0]  %s200, 256, %s4, [#allocation4], 128, 128, 8
    $region33: #{tpu_custom_call.1} parent=1 // pred_fallthru
      _
    // Predicated region
    $region34: #{tpu_custom_call.1} parent=1 // pred_check
      _
    $region35: #{tpu_custom_call.1} parent=1 // pred_check_branch
      %207 = sbr.rel (0) target = $region37
    $region36: #{tpu_custom_call.1} parent=1 // pred_region
      %208 = dma.done [#allocation4], 256
    $region37: #{tpu_custom_call.1} parent=1 // pred_fallthru
      _
    %209 = vsyncpa [#allocation3], 1
    %210 = vsyncpa [#allocation7], 1
    %211 = vsyncpa [#allocation4], 1
    %212 = vsyncpa [#allocation5], 1

</llo_original>
